<compile_context>
chip_gen: v6e
topology: v6e:2x2x1
jax: 0.10.0
libtpu: 0.0.40
codegen_flags: <defaults>
</compile_context>

<pallas_src>
import functools
import math

import jax
import jax.numpy as jnp
from jax.experimental import pallas as pl
from jax.experimental.pallas import tpu as pltpu

_INV_SQRT2 = 1.0 / math.sqrt(2.0)


def _round_up(x, m):
    return (x + m - 1) // m * m


# ---------------------------------------------------------------------------
# Kernel 1: elementwise exact GELU (nn.GELU() default) + cast to compute dtype.
# ---------------------------------------------------------------------------
def _act_cast_kernel(x_ref, o_ref, *, use_activation):
    xf = x_ref[...].astype(jnp.float32)
    if use_activation:
        # Exact GELU: 0.5 * x * (1 + erf(x / sqrt(2)))
        xf = 0.5 * xf * (1.0 + jax.lax.erf(xf * _INV_SQRT2))
    o_ref[...] = xf.astype(o_ref.dtype)


def _activation_pass(xp, compute_dtype, use_activation, bm, bk):
    Bp, Kp = xp.shape
    grid = (Bp // bm, Kp // bk)
    cost = pl.CostEstimate(
        flops=4 * Bp * Kp,
        transcendentals=(Bp * Kp) if use_activation else 0,
        bytes_accessed=(xp.size * xp.dtype.itemsize
                        + Bp * Kp * jnp.dtype(compute_dtype).itemsize),
    )
    return pl.pallas_call(
        functools.partial(_act_cast_kernel, use_activation=use_activation),
        out_shape=jax.ShapeDtypeStruct((Bp, Kp), compute_dtype),
        grid_spec=pltpu.PrefetchScalarGridSpec(
            num_scalar_prefetch=0,
            grid=grid,
            in_specs=[pl.BlockSpec((bm, bk), lambda i, k: (i, k))],
            out_specs=pl.BlockSpec((bm, bk), lambda i, k: (i, k)),
        ),
        compiler_params=pltpu.CompilerParams(
            dimension_semantics=("parallel", "parallel"),
            vmem_limit_bytes=48 * 1024 * 1024,
        ),
        cost_estimate=cost,
    )(xp)


# ---------------------------------------------------------------------------
# Kernel 2: tiled matmul + bias.  Grid (i, j, k); k (reduction) is last.
# ---------------------------------------------------------------------------
def _matmul_bias_kernel(g_ref, w_ref, b_ref, o_ref, acc_ref):
    k = pl.program_id(2)
    nk = pl.num_programs(2)

    part = jnp.dot(g_ref[...], w_ref[...], preferred_element_type=jnp.float32)

    @pl.when(k == 0)
    def _init():
        acc_ref[...] = part            # first K step writes; no zero + RMW

    @pl.when(k > 0)
    def _accumulate():
        acc_ref[...] += part

    @pl.when(k == nk - 1)
    def _finalize():
        out = acc_ref[...] + b_ref[...].astype(jnp.float32)
        o_ref[...] = out.astype(o_ref.dtype)


# ---------------------------------------------------------------------------
# Tile selection with an explicit VMEM budget (conservative for v7x 64 MiB/TC).
# ---------------------------------------------------------------------------
_VMEM_TILE_BUDGET = 40 * 1024 * 1024


def _tile_vmem_bytes(tm, tn, tk, ce_item, out_item):
    g = 2 * tm * tk * ce_item          # double-buffered activation tile
    w = 2 * tk * tn * ce_item          # double-buffered weight tile
    b = 2 * tn * 4                     # bias tile (f32)
    o = 2 * tm * tn * out_item         # double-buffered output tile
    acc = tm * tn * 4                  # f32 accumulator scratch
    return g + w + b + o + acc


def _fit_tiles(tm, tn, tk, ce_item, out_item):
    for _ in range(32):
        if _tile_vmem_bytes(tm, tn, tk, ce_item, out_item) <= _VMEM_TILE_BUDGET:
            break
        cand = []
        if tm > 8:
            cand.append(("tm", tm))
        if tn > 128:
            cand.append(("tn", tn))
        if tk > 128:
            cand.append(("tk", tk))
        if not cand:
            break
        name = max(cand, key=lambda t: t[1])[0]
        if name == "tm":
            tm = max(8, ((tm // 2) + 7) // 8 * 8)
        elif name == "tn":
            tn = max(128, (tn // 2) // 128 * 128)
        else:
            tk = max(128, (tk // 2) // 128 * 128)
    return tm, tn, tk


def fc_layer(x, weight, bias, *, use_activation=True,
             compute_dtype=jnp.bfloat16, tm=512, tn=1024, tk=512):
    """x: [B, D_in], weight: [D_in, D_out], bias: [D_out] -> [B, D_out].

    Computes Linear(GELU(Dropout(x))) with dropout as identity (eval mode).
    """
    B, D_in = x.shape
    D_out = weight.shape[1]
    out_dtype = x.dtype
    ce_item = jnp.dtype(compute_dtype).itemsize
    out_item = jnp.dtype(out_dtype).itemsize

    # Clamp tiles to the (8/128-rounded) problem dims; keep alignment.
    tm = min(tm, _round_up(B, 8))
    tk = min(tk, _round_up(D_in, 128))
    tn = min(tn, _round_up(D_out, 128))
    tm, tn, tk = _fit_tiles(tm, tn, tk, ce_item, out_item)

    Bp = _round_up(B, tm)
    Kp = _round_up(D_in, tk)
    Np = _round_up(D_out, tn)

    # Pad only when shapes are not already tile-aligned.  NOTE: in a real
    # model the weight cast/pad is static and should be hoisted out of the
    # hot path (done once at parameter-load time).
    xp = x if (Bp == B and Kp == D_in) else jnp.pad(
        x, ((0, Bp - B), (0, Kp - D_in)))
    w_c = weight if weight.dtype == compute_dtype else weight.astype(compute_dtype)
    wp = w_c if (Kp == D_in and Np == D_out) else jnp.pad(
        w_c, ((0, Kp - D_in), (0, Np - D_out)))
    bp = bias if Np == D_out else jnp.pad(bias, (0, Np - D_out))
    bp = bp.astype(jnp.float32).reshape(1, Np)

    # GELU / cast pre-pass (skipped when it would be a pure no-op).
    if use_activation or xp.dtype != compute_dtype:
        gp = _activation_pass(xp, compute_dtype, use_activation, tm, tk)
    else:
        gp = xp

    ni, nj, nk = Bp // tm, Np // tn, Kp // tk

    cost = pl.CostEstimate(
        flops=2 * Bp * Kp * Np,
        transcendentals=0,
        bytes_accessed=(Bp * Kp * ce_item * nj       # GELU(x) streamed per N tile
                        + Kp * Np * ce_item * ni     # W streamed per M tile
                        + Np * 4                      # bias
                        + Bp * Np * out_item),        # output
    )

    out = pl.pallas_call(
        _matmul_bias_kernel,
        out_shape=jax.ShapeDtypeStruct((Bp, Np), out_dtype),
        grid_spec=pltpu.PrefetchScalarGridSpec(
            num_scalar_prefetch=0,
            grid=(ni, nj, nk),
            in_specs=[
                pl.BlockSpec((tm, tk), lambda i, j, k: (i, k)),   # GELU(x) tile
                pl.BlockSpec((tk, tn), lambda i, j, k: (k, j)),   # W tile
                pl.BlockSpec((1, tn), lambda i, j, k: (0, j)),    # bias tile
            ],
            out_specs=pl.BlockSpec((tm, tn), lambda i, j, k: (i, j)),
            scratch_shapes=[pltpu.VMEM((tm, tn), jnp.float32)],
        ),
        compiler_params=pltpu.CompilerParams(
            # No cross-j dependency anymore (GELU is a pre-pass), so both M
            # and N are parallel; K stays the sequential reduction.
            dimension_semantics=("parallel", "parallel", "arbitrary"),
            vmem_limit_bytes=48 * 1024 * 1024,
        ),
        cost_estimate=cost,
    )(gp, wp, bp)

    if Bp == B and Np == D_out:
        return out
    return out[:B, :D_out]


if __name__ == "__main__":
    key = jax.random.PRNGKey(0)
    k_x, k_w, k_b = jax.random.split(key, 3)

    batch, input_dim, output_dim = 8, 32, 16

    x = jax.random.normal(k_x, (batch, input_dim), dtype=jnp.float32)

    # Deterministic PyTorch-style Linear init: U(-1/sqrt(in), 1/sqrt(in)).
    bound = 1.0 / math.sqrt(input_dim)
    weight = jax.random.uniform(k_w, (input_dim, output_dim),
                                minval=-bound, maxval=bound, dtype=jnp.float32)
    bias = jax.random.uniform(k_b, (output_dim,),
                              minval=-bound, maxval=bound, dtype=jnp.float32)

    # TODO(synk): nn.Dropout is identity in eval mode; training-mode dropout
    # (stochastic masking via pltpu.prng_seed / prng_random_bits) not implemented.

    ref_act = jax.nn.gelu(x, approximate=False) @ weight + bias
    ref_noact = x @ weight + bias

    # 1) f32 MXU path (numerics faithful to the f32 PyTorch reference).
    out_f32 = fc_layer(x, weight, bias, compute_dtype=jnp.float32)
    jax.block_until_ready(out_f32)
    assert out_f32.shape == ref_act.shape, "shape mismatch vs reference"
    assert jnp.allclose(out_f32, ref_act, atol=1e-4, rtol=1e-4), \
        "f32 path mismatch vs reference"

    # 2) default bf16 MXU path (fast path; bf16-appropriate tolerance).
    out_bf16 = fc_layer(x, weight, bias)
    jax.block_until_ready(out_bf16)
    assert jnp.allclose(out_bf16, ref_act, atol=5e-2, rtol=5e-2), \
        "bf16 path mismatch vs reference"

    # 3) use_activation=False (dropout identity -> plain Linear).
    out_noact = fc_layer(x, weight, bias, use_activation=False,
                         compute_dtype=jnp.float32)
    jax.block_until_ready(out_noact)
    assert jnp.allclose(out_noact, ref_noact, atol=1e-4, rtol=1e-4), \
        "no-activation path mismatch vs reference"

    print("KERNEL_OK")
</pallas_src>

<mosaic_0001>
module attributes {stable_mosaic.version = 11 : i64} {
  func.func @_act_cast_kernel(%arg0: i32, %arg1: i32, %arg2: memref<8x128xf32, #tpu.memory_space<vmem>>, %arg3: memref<8x128xf32, #tpu.memory_space<vmem>>) attributes {dimension_semantics = [#tpu.dimension_semantics<parallel>, #tpu.dimension_semantics<parallel>], iteration_bounds = array<i64: 1, 1>, scalar_prefetch = 0 : i64, scratch_operands = 0 : i64, tpu.core_type = #tpu.core_type<tc>, window_params = [{transform_indices = @transform_0, window_bounds = array<i64: 8, 128>}, {transform_indices = @transform_1, window_bounds = array<i64: 8, 128>}]} {
    %c0 = arith.constant 0 : index
    %c0_0 = arith.constant 0 : index
    %0 = vector.load %arg2[%c0, %c0_0] : memref<8x128xf32, #tpu.memory_space<vmem>>, vector<8x128xf32>
    %cst = arith.constant 5.000000e-01 : f32
    %1 = vector.broadcast %cst : f32 to vector<8x128xf32>
    %2 = arith.mulf %1, %0 : vector<8x128xf32>
    %cst_1 = arith.constant 0.707106769 : f32
    %3 = vector.broadcast %cst_1 : f32 to vector<8x128xf32>
    %4 = arith.mulf %0, %3 : vector<8x128xf32>
    %5 = math.erf %4 : vector<8x128xf32>
    %cst_2 = arith.constant 1.000000e+00 : f32
    %6 = vector.broadcast %cst_2 : f32 to vector<8x128xf32>
    %7 = arith.addf %6, %5 : vector<8x128xf32>
    %8 = arith.mulf %2, %7 : vector<8x128xf32>
    %c0_3 = arith.constant 0 : index
    %c0_4 = arith.constant 0 : index
    %9 = vector.load %arg3[%c0_3, %c0_4] : memref<8x128xf32, #tpu.memory_space<vmem>>, vector<8x128xf32>
    tpu.vector_store %arg3[%c0_3, %c0_4], %8 {strides = array<i32>} : memref<8x128xf32, #tpu.memory_space<vmem>>, vector<8x128xf32>,
    return
  }
  func.func @transform_0(%arg0: i32, %arg1: i32) -> (i32, i32) {
    %c0_i32 = arith.constant 0 : i32
    return %arg0, %arg1 : i32, i32
  }
  func.func @transform_1(%arg0: i32, %arg1: i32) -> (i32, i32) {
    %c0_i32 = arith.constant 0 : i32
    return %arg0, %arg1 : i32, i32
  }
}

</mosaic_0001>

<llo_original>
// kernel: tpu_custom_call.1
$region0: #{tpu_custom_call.1}
  #allocation0 [shape = 'u32[]', space=smem, size = 0x4, offset = 0x4, fixed_abs, tag = 'smem constant byte address 0x4 - core index']
  #allocation1 [shape = 'u32[144,128]{1,0:T(1,128)}', space=vmem, size = 0x12000, scoped, tag = 'internal scratch']
  %s0 = inlined_call_operand.hbm [shape: f32[8,128], index: 0, kind: input, shape index: {}]
  %s1 = inlined_call_operand.hbm [shape: f32[8,128], index: 1, kind: output, shape index: {}]
  %s2 = sld [smem:[#allocation0]]
  $region18: #{tpu_custom_call.1} parent=0
    _
  %s4 = ssub.s32 1, %s2
  %s5 = scalar_select 0, %s4, %s2
  $region1: #{tpu_custom_call.1} parent=0
    #allocation2 [shape = 'u8[4096]{0}', space=vmem, size = 0x1000, scoped, tag = 'input window, operand 0, single buffered']
    #allocation3 [shape = 's32[1]{0}', space=sflag, size = 0x4, scoped, tag = 'scoped memory for tpu_custom_call.1']
    #allocation4 [shape = 's32[1]{0}', space=sflag, size = 0x4, scoped, tag = 'scoped memory for tpu_custom_call.1']
    #allocation5 [shape = 'u8[4096]{0}', space=vmem, size = 0x1000, scoped, tag = 'output window, operand 0, single buffered']
    %6 = vsyncpa [#allocation3], 0
    %7 = vsyncpa [#allocation4], 0
    // Predicated region
    $region2: #{tpu_custom_call.1} parent=1 // pred_check
      _
    $region3: #{tpu_custom_call.1} parent=1 // pred_check_branch
      %9 = sbr.rel (0) target = $region5
    $region4: #{tpu_custom_call.1} parent=1 // pred_region
      %s11 = ssub.s32 128, 128
      %12 = vsyncadd [#allocation3], %s11
      %s14 = sshll.u32 [#allocation2], 4
      %s15 = int_to_ptr.vmem [resolvable:$true] %s14
      %17 = dma.hbm_to_vmem [thread:$0]  %s0, 128, %s15, [#allocation3]
    $region5: #{tpu_custom_call.1} parent=1 // pred_fallthru
      _
    // Predicated region
    $region6: #{tpu_custom_call.1} parent=1 // pred_check
      _
    $region7: #{tpu_custom_call.1} parent=1 // pred_check_branch
      %19 = sbr.rel (0) target = $region9
    $region8: #{tpu_custom_call.1} parent=1 // pred_region
      %20 = dma.done [#allocation3], 128
    $region9: #{tpu_custom_call.1} parent=1 // pred_fallthru
      _
    %v21 = vld [vmem:[#allocation2] sm:$0xff]
    %v22 = vmul.f32 %v21, 0.5
    %v23 = vmul.f32 %v21, 0.70710677
    %v24 = verf.f32.pop %v23
    %v25 = vadd.f32 %v24, 1.0
    %v26 = vmul.f32 %v22, %v25
    %27 = vst [vmem:[#allocation5] sm:$0xff] %v26
    // Predicated region
    $region10: #{tpu_custom_call.1} parent=1 // pred_check
      _
    $region11: #{tpu_custom_call.1} parent=1 // pred_check_branch
      %29 = sbr.rel (0) target = $region13
    $region12: #{tpu_custom_call.1} parent=1 // pred_region
      %s31 = ssub.s32 128, 128
      %32 = vsyncadd [#allocation4], %s31
      %s34 = sshll.u32 [#allocation5], 4
      %s35 = int_to_ptr.vmem [resolvable:$true] %s34
      %37 = dma.vmem_to_hbm [thread:$0]  %s35, 128, %s1, [#allocation4]
    $region13: #{tpu_custom_call.1} parent=1 // pred_fallthru
      _
    // Predicated region
    $region14: #{tpu_custom_call.1} parent=1 // pred_check
      _
    $region15: #{tpu_custom_call.1} parent=1 // pred_check_branch
      %39 = sbr.rel (0) target = $region17
    $region16: #{tpu_custom_call.1} parent=1 // pred_region
      %40 = dma.done [#allocation4], 128
    $region17: #{tpu_custom_call.1} parent=1 // pred_fallthru
      _
    %41 = vsyncpa [#allocation3], 1
    %42 = vsyncpa [#allocation4], 1

</llo_original>
